<compile_context>
chip_gen: v6e
topology: v6e:2x2x1
jax: 0.10.0
libtpu: 0.0.40
codegen_flags: <defaults>
</compile_context>

<pallas_src>
import functools

import jax
import jax.numpy as jnp
from jax.experimental import pallas as pl
from jax.experimental.pallas import tpu as pltpu


def _round_up(x, m):
    return (x + m - 1) // m * m


def _gru_gating_kernel(x_ref, wu_ref, ww_ref, b_ref, g_ref, o_ref,
                       *, dim, dp, eps):
    # h = original rows (f32), y = RMSNorm(h).  Padded lanes of x are zero so
    # they do not perturb the sum of squares; `dim` is the un-padded size.
    h = x_ref[...].astype(jnp.float32)                                # (tm, dp)
    norm = jnp.sqrt(jnp.sum(h * h, axis=-1, keepdims=True)) * (dim ** -0.5)
    inv_norm = pl.reciprocal(jnp.maximum(norm, eps), approx=True)     # EUP
    y = h * inv_norm * g_ref[...]                                     # (tm, dp)

    y_bf = y.astype(jnp.bfloat16)
    h_bf = h.astype(jnp.bfloat16)

    # Two fused MXU matmuls (f32 accumulation):
    #   pre_u = y @ [Ua|Uc|U] + (fused bias)      -> (tm, 3dp)
    #   pre_w = h @ [Wa|Wc]                       -> (tm, 2dp)
    pre_u = jnp.dot(y_bf, wu_ref[...], preferred_element_type=jnp.float32)
    pre_u = pre_u + b_ref[...]
    pre_w = jnp.dot(h_bf, ww_ref[...], preferred_element_type=jnp.float32)

    a_pre = pre_u[:, 0:dp] + pre_w[:, 0:dp]
    c_pre = pre_u[:, dp:2 * dp] + pre_w[:, dp:2 * dp]
    u_pre = pre_u[:, 2 * dp:3 * dp]

    a = 1.0 + jnp.tanh(a_pre)
    c = jax.nn.sigmoid(c_pre)
    out = c * h + (1.0 - c) * jnp.tanh(u_pre + a * h)
    o_ref[...] = out.astype(o_ref.dtype)


def gru_gating_forward(x, params, *, eps=1e-8, tm=256):
    """x: (..., D) float32. params: pre-transposed (D_in, D_out) weights,
    (D,) biases and RMSNorm gain `g`."""
    shape = x.shape
    dim = shape[-1]
    x2 = x.reshape(-1, dim)
    n = x2.shape[0]

    dp = _round_up(dim, 128)                  # lane-dense feature dim
    tm_eff = min(tm, _round_up(n, 8))         # don't oversize tile for tiny inputs
    n_pad = _round_up(n, tm_eff)

    x_p = jnp.pad(x2, ((0, n_pad - n), (0, dp - dim)))

    def pad_w(w):
        return jnp.pad(w.astype(jnp.float32), ((0, dp - dim), (0, dp - dim)))

    def pad_b(b):
        return jnp.pad(b.astype(jnp.float32), (0, dp - dim))

    # Column-fused weights, cast to bf16 once (MXU-native); f32 accum in-kernel.
    wu = jnp.concatenate([pad_w(params["Ua_w"]),
                          pad_w(params["Uc_w"]),
                          pad_w(params["U_w"])], axis=1).astype(jnp.bfloat16)   # (dp, 3dp)
    ww = jnp.concatenate([pad_w(params["Wa_w"]),
                          pad_w(params["Wc_w"])], axis=1).astype(jnp.bfloat16)  # (dp, 2dp)

    b_big = jnp.concatenate(
        [pad_b(params["Ua_b"] + params["Wa_b"]),
         pad_b(params["Uc_b"] + params["Wc_b"]),
         pad_b(params["U_b"])]).reshape(1, 3 * dp).astype(jnp.float32)

    g = pad_b(params["g"]).reshape(1, dp)

    kernel = functools.partial(_gru_gating_kernel, dim=dim, dp=dp, eps=eps)

    # VMEM budget: x/out tiles double-buffered (f32) + resident bf16 weights
    # + in-kernel f32 intermediates (y, pre_u, pre_w, ...), plus headroom.
    w_bytes = (dp * 3 * dp + dp * 2 * dp) * 2
    tile_bytes = tm_eff * dp * 4
    vmem_bytes = (2 * 2 * tile_bytes           # x + out, double-buffered
                  + 2 * w_bytes                # fused bf16 weights (2 bufs worst case)
                  + 2 * 4 * dp * 4             # bias + gain
                  + tm_eff * 8 * dp * 4        # intermediates (rough)
                  + (4 << 20))                 # headroom
    vmem_limit = int(min(max(vmem_bytes, 32 << 20), 64 << 20))

    out = pl.pallas_call(
        kernel,
        out_shape=jax.ShapeDtypeStruct((n_pad, dp), x.dtype),
        grid_spec=pltpu.PrefetchScalarGridSpec(
            num_scalar_prefetch=0,
            grid=(n_pad // tm_eff,),
            in_specs=[
                pl.BlockSpec((tm_eff, dp), lambda i: (i, 0)),       # x rows
                pl.BlockSpec((dp, 3 * dp), lambda i: (0, 0)),       # [Ua|Uc|U]
                pl.BlockSpec((dp, 2 * dp), lambda i: (0, 0)),       # [Wa|Wc]
                pl.BlockSpec((1, 3 * dp), lambda i: (0, 0)),        # fused bias
                pl.BlockSpec((1, dp), lambda i: (0, 0)),            # RMSNorm gain
            ],
            out_specs=pl.BlockSpec((tm_eff, dp), lambda i: (i, 0)),
        ),
        compiler_params=pltpu.CompilerParams(
            dimension_semantics=("parallel",),
            vmem_limit_bytes=vmem_limit),
    )(x_p, wu, ww, b_big, g)

    return out[:n, :dim].reshape(shape)


def _reference(x, params, eps=1e-8):
    dim = x.shape[-1]
    h = x.reshape(-1, dim).astype(jnp.float32)
    norm = jnp.sqrt(jnp.sum(h * h, axis=-1, keepdims=True)) * dim ** (-0.5)
    y = h / jnp.maximum(norm, eps) * params["g"]
    a = 1.0 + jnp.tanh(y @ params["Ua_w"] + params["Ua_b"]
                       + h @ params["Wa_w"] + params["Wa_b"])
    c = jax.nn.sigmoid(y @ params["Uc_w"] + params["Uc_b"]
                       + h @ params["Wc_w"] + params["Wc_b"])
    out = c * h + (1.0 - c) * jnp.tanh(y @ params["U_w"] + params["U_b"] + a * h)
    return out.reshape(x.shape)


def init_params(key, dim):
    """nn.Linear-style init: U(-1/sqrt(dim), 1/sqrt(dim)).
    Weights stored pre-transposed as (D_in, D_out)."""
    bound = 1.0 / (dim ** 0.5)
    keys = jax.random.split(key, 11)
    p = {}
    names = ["Ua", "Wa", "Uc", "Wc", "U"]
    for i, name in enumerate(names):
        p[f"{name}_w"] = jax.random.uniform(
            keys[2 * i], (dim, dim), jnp.float32, -bound, bound)
        p[f"{name}_b"] = jax.random.uniform(
            keys[2 * i + 1], (dim,), jnp.float32, -bound, bound)
    p["g"] = jnp.ones((dim,), jnp.float32)   # RMSNorm gain
    return p


if __name__ == "__main__":
    B, S, D = 2, 8, 32
    key = jax.random.PRNGKey(0)
    kx, kp = jax.random.split(key)
    x = jax.random.normal(kx, (B, S, D), jnp.float32)
    params = init_params(kp, D)

    out = jax.block_until_ready(gru_gating_forward(x, params))
    ref = _reference(x, params)

    assert out.shape == x.shape
    # Kernel feeds the MXU bf16 operands (f32 accumulation); compare against
    # the pure-f32 reference with a correspondingly loosened tolerance.
    max_err = float(jnp.max(jnp.abs(out - ref)))
    assert jnp.allclose(out, ref, atol=5e-2, rtol=5e-2), (
        f"mismatch vs reference, max abs err = {max_err}")

    print("KERNEL_OK")
</pallas_src>

<mosaic_0001>
module attributes {stable_mosaic.version = 11 : i64} {
  func.func @_gru_gating_kernel(%arg0: i32, %arg1: memref<16x128xf32, #tpu.memory_space<vmem>>, %arg2: memref<128x384xbf16, #tpu.memory_space<vmem>>, %arg3: memref<128x256xbf16, #tpu.memory_space<vmem>>, %arg4: memref<1x384xf32, #tpu.memory_space<vmem>>, %arg5: memref<1x128xf32, #tpu.memory_space<vmem>>, %arg6: memref<16x128xf32, #tpu.memory_space<vmem>>) attributes {dimension_semantics = [#tpu.dimension_semantics<parallel>], iteration_bounds = array<i64: 1>, scalar_prefetch = 0 : i64, scratch_operands = 0 : i64, tpu.core_type = #tpu.core_type<tc>, window_params = [{transform_indices = @transform_0, window_bounds = array<i64: 16, 128>}, {pipeline_mode = #tpu.pipeline_mode<synchronous>, transform_indices = @transform_1, window_bounds = array<i64: 128, 384>}, {pipeline_mode = #tpu.pipeline_mode<synchronous>, transform_indices = @transform_2, window_bounds = array<i64: 128, 256>}, {pipeline_mode = #tpu.pipeline_mode<synchronous>, transform_indices = @transform_3, window_bounds = array<i64: 1, 384>}, {pipeline_mode = #tpu.pipeline_mode<synchronous>, transform_indices = @transform_4, window_bounds = array<i64: 1, 128>}, {transform_indices = @transform_5, window_bounds = array<i64: 16, 128>}]} {
    %c0 = arith.constant 0 : index
    %c0_0 = arith.constant 0 : index
    %0 = vector.load %arg1[%c0, %c0_0] : memref<16x128xf32, #tpu.memory_space<vmem>>, vector<16x128xf32>
    %1 = arith.mulf %0, %0 : vector<16x128xf32>
    %cst = arith.constant dense<0.000000e+00> : vector<16xf32>
    %2 = vector.multi_reduction <add>, %1, %cst [1] : vector<16x128xf32> to vector<16xf32>
    %3 = vector.shape_cast %2 : vector<16xf32> to vector<16x1xf32>
    %4 = math.sqrt %3 : vector<16x1xf32>
    %cst_1 = arith.constant 0.176776692 : f32
    %5 = vector.broadcast %cst_1 : f32 to vector<16x1xf32>
    %6 = arith.mulf %4, %5 : vector<16x1xf32>
    %cst_2 = arith.constant 9.99999993E-9 : f32
    %7 = vector.broadcast %cst_2 : f32 to vector<16x1xf32>
    %8 = arith.maximumf %6, %7 : vector<16x1xf32>
    %9 = tpu.reciprocal %8 {approx = true} : vector<16x1xf32> -> vector<16x1xf32>
    %10 = vector.broadcast %9 : vector<16x1xf32> to vector<16x128xf32>
    %11 = arith.mulf %0, %10 : vector<16x128xf32>
    %c0_3 = arith.constant 0 : index
    %c0_4 = arith.constant 0 : index
    %12 = vector.load %arg5[%c0_3, %c0_4] : memref<1x128xf32, #tpu.memory_space<vmem>>, vector<1x128xf32>
    %13 = vector.broadcast %12 : vector<1x128xf32> to vector<16x128xf32>
    %14 = arith.mulf %11, %13 : vector<16x128xf32>
    %15 = arith.truncf %14 : vector<16x128xf32> to vector<16x128xbf16>
    %16 = arith.truncf %0 : vector<16x128xf32> to vector<16x128xbf16>
    %c0_5 = arith.constant 0 : index
    %c0_6 = arith.constant 0 : index
    %17 = vector.load %arg2[%c0_5, %c0_6] : memref<128x384xbf16, #tpu.memory_space<vmem>>, vector<128x384xbf16>
    %cst_7 = arith.constant dense<0.000000e+00> : vector<16x384xf32>
    %18 = tpu.matmul %15, %17, %cst_7 {dimension_numbers = #tpu.dot_dimension_numbers<[1], [0], [0], [1], [0, 0, 1, 1], [], []>} : vector<16x128xbf16>, vector<128x384xbf16>, vector<16x384xf32> -> vector<16x384xf32>
    %c0_8 = arith.constant 0 : index
    %c0_9 = arith.constant 0 : index
    %19 = vector.load %arg4[%c0_8, %c0_9] : memref<1x384xf32, #tpu.memory_space<vmem>>, vector<1x384xf32>
    %20 = vector.broadcast %19 : vector<1x384xf32> to vector<16x384xf32>
    %21 = arith.addf %18, %20 : vector<16x384xf32>
    %c0_10 = arith.constant 0 : index
    %c0_11 = arith.constant 0 : index
    %22 = vector.load %arg3[%c0_10, %c0_11] : memref<128x256xbf16, #tpu.memory_space<vmem>>, vector<128x256xbf16>
    %cst_12 = arith.constant dense<0.000000e+00> : vector<16x256xf32>
    %23 = tpu.matmul %16, %22, %cst_12 {dimension_numbers = #tpu.dot_dimension_numbers<[1], [0], [0], [1], [0, 0, 1, 1], [], []>} : vector<16x128xbf16>, vector<128x256xbf16>, vector<16x256xf32> -> vector<16x256xf32>
    %24 = vector.extract_strided_slice %21 {offsets = [0, 0], sizes = [16, 128], strides = [1, 1]} : vector<16x384xf32> to vector<16x128xf32>
    %25 = vector.extract_strided_slice %23 {offsets = [0, 0], sizes = [16, 128], strides = [1, 1]} : vector<16x256xf32> to vector<16x128xf32>
    %26 = arith.addf %24, %25 : vector<16x128xf32>
    %27 = vector.extract_strided_slice %21 {offsets = [0, 128], sizes = [16, 128], strides = [1, 1]} : vector<16x384xf32> to vector<16x128xf32>
    %28 = vector.extract_strided_slice %23 {offsets = [0, 128], sizes = [16, 128], strides = [1, 1]} : vector<16x256xf32> to vector<16x128xf32>
    %29 = arith.addf %27, %28 : vector<16x128xf32>
    %30 = vector.extract_strided_slice %21 {offsets = [0, 256], sizes = [16, 128], strides = [1, 1]} : vector<16x384xf32> to vector<16x128xf32>
    %31 = math.tanh %26 : vector<16x128xf32>
    %cst_13 = arith.constant 1.000000e+00 : f32
    %32 = vector.broadcast %cst_13 : f32 to vector<16x128xf32>
    %33 = arith.addf %32, %31 : vector<16x128xf32>
    %34 = arith.negf %29 : vector<16x128xf32>
    %35 = math.exp %34 : vector<16x128xf32>
    %cst_14 = arith.constant 1.000000e+00 : f32
    %36 = vector.broadcast %cst_14 : f32 to vector<16x128xf32>
    %37 = arith.addf %36, %35 : vector<16x128xf32>
    %38 = arith.divf %36, %37 : vector<16x128xf32>
    %39 = arith.mulf %38, %0 : vector<16x128xf32>
    %cst_15 = arith.constant 1.000000e+00 : f32
    %40 = vector.broadcast %cst_15 : f32 to vector<16x128xf32>
    %41 = arith.subf %40, %38 : vector<16x128xf32>
    %42 = arith.mulf %33, %0 : vector<16x128xf32>
    %43 = arith.addf %30, %42 : vector<16x128xf32>
    %44 = math.tanh %43 : vector<16x128xf32>
    %45 = arith.mulf %41, %44 : vector<16x128xf32>
    %46 = arith.addf %39, %45 : vector<16x128xf32>
    %c0_16 = arith.constant 0 : index
    %c0_17 = arith.constant 0 : index
    %47 = vector.load %arg6[%c0_16, %c0_17] : memref<16x128xf32, #tpu.memory_space<vmem>>, vector<16x128xf32>
    tpu.vector_store %arg6[%c0_16, %c0_17], %46 {strides = array<i32>} : memref<16x128xf32, #tpu.memory_space<vmem>>, vector<16x128xf32>,
    return
  }
  func.func @transform_0(%arg0: i32) -> (i32, i32) {
    %c0_i32 = arith.constant 0 : i32
    %c0_i32_0 = arith.constant 0 : i32
    return %arg0, %c0_i32 : i32, i32
  }
  func.func @transform_1(%arg0: i32) -> (i32, i32) {
    %c0_i32 = arith.constant 0 : i32
    %c0_i32_0 = arith.constant 0 : i32
    %c0_i32_1 = arith.constant 0 : i32
    return %c0_i32, %c0_i32_0 : i32, i32
  }
  func.func @transform_2(%arg0: i32) -> (i32, i32) {
    %c0_i32 = arith.constant 0 : i32
    %c0_i32_0 = arith.constant 0 : i32
    %c0_i32_1 = arith.constant 0 : i32
    return %c0_i32, %c0_i32_0 : i32, i32
  }
  func.func @transform_3(%arg0: i32) -> (i32, i32) {
    %c0_i32 = arith.constant 0 : i32
    %c0_i32_0 = arith.constant 0 : i32
    %c0_i32_1 = arith.constant 0 : i32
    return %c0_i32, %c0_i32_0 : i32, i32
  }
  func.func @transform_4(%arg0: i32) -> (i32, i32) {
    %c0_i32 = arith.constant 0 : i32
    %c0_i32_0 = arith.constant 0 : i32
    %c0_i32_1 = arith.constant 0 : i32
    return %c0_i32, %c0_i32_0 : i32, i32
  }
  func.func @transform_5(%arg0: i32) -> (i32, i32) {
    %c0_i32 = arith.constant 0 : i32
    %c0_i32_0 = arith.constant 0 : i32
    return %arg0, %c0_i32 : i32, i32
  }
}

</mosaic_0001>

<llo_original>
// kernel: tpu_custom_call.1
$region0: #{tpu_custom_call.1}
  #allocation0 [shape = 'u32[]', space=smem, size = 0x4, offset = 0x4, fixed_abs, tag = 'smem constant byte address 0x4 - core index']
  #allocation1 [shape = 'u32[144,128]{1,0:T(1,128)}', space=vmem, size = 0x12000, scoped, tag = 'internal scratch']
  %s0 = inlined_call_operand.hbm [shape: f32[16,128], index: 0, kind: input, shape index: {}]
  %s1 = inlined_call_operand.hbm [shape: bf16[128,384], index: 1, kind: input, shape index: {}]
  %s2 = inlined_call_operand.hbm [shape: bf16[128,256], index: 2, kind: input, shape index: {}]
  %s3 = inlined_call_operand.vmem [shape: f32[1,384], index: 3, kind: input, shape index: {}]
  %s4 = inlined_call_operand.vmem [shape: f32[1,128], index: 4, kind: input, shape index: {}]
  %s5 = inlined_call_operand.hbm [shape: f32[16,128], index: 5, kind: output, shape index: {}]
  %s6 = sld [smem:[#allocation0]]
  $region42: #{tpu_custom_call.1} parent=0
    _
  %s8 = ssub.s32 1, %s6
  %s9 = scalar_select 0, %s8, %s6
  $region1: #{tpu_custom_call.1} parent=0
    #allocation2 [shape = 'u8[8192]{0}', space=vmem, size = 0x2000, scoped, tag = 'input window, operand 0, single buffered']
    #allocation3 [shape = 's32[1]{0}', space=sflag, size = 0x4, scoped, tag = 'scoped memory for tpu_custom_call.1']
    #allocation4 [shape = 's32[1]{0}', space=sflag, size = 0x4, scoped, tag = 'scoped memory for tpu_custom_call.1']
    #allocation5 [shape = 'u8[98304]{0}', space=vmem, size = 0x18000, scoped, tag = 'input window, operand 1, single buffered']
    #allocation6 [shape = 's32[1]{0}', space=sflag, size = 0x4, scoped, tag = 'scoped memory for tpu_custom_call.1']
    #allocation7 [shape = 'u8[65536]{0}', space=vmem, size = 0x10000, scoped, tag = 'input window, operand 2, single buffered']
    #allocation8 [shape = 'u8[8192]{0}', space=vmem, size = 0x2000, scoped, tag = 'output window, operand 0, single buffered']
    %10 = vsyncpa [#allocation3], 0
    %11 = vsyncpa [#allocation6], 0
    %12 = vsyncpa [#allocation4], 0
    // Predicated region
    $region2: #{tpu_custom_call.1} parent=1 // pred_check
      _
    $region3: #{tpu_custom_call.1} parent=1 // pred_check_branch
      %14 = sbr.rel (0) target = $region5
    $region4: #{tpu_custom_call.1} parent=1 // pred_region
      %s16 = ssub.s32 256, 256
      %17 = vsyncadd [#allocation3], %s16
      %s18 = sshll.u32 [#allocation2], 4
      %s19 = int_to_ptr.vmem [resolvable:$true] %s18
      %24 = dma.hbm_to_vmem [thread:$0]  %s0, 256, %s19, [#allocation3], 128, 128, 8
    $region5: #{tpu_custom_call.1} parent=1 // pred_fallthru
      _
    // Predicated region
    $region6: #{tpu_custom_call.1} parent=1 // pred_check
      _
    $region7: #{tpu_custom_call.1} parent=1 // pred_check_branch
      %26 = sbr.rel (0) target = $region9
    $region8: #{tpu_custom_call.1} parent=1 // pred_region
      %s28 = ssub.s32 3072, 3072
      %29 = vsyncadd [#allocation6], %s28
      %s30 = sshll.u32 [#allocation5], 4
      %s31 = int_to_ptr.vmem [resolvable:$true] %s30
      %36 = dma.hbm_to_vmem [thread:$0]  %s1, 3072, %s31, [#allocation6], 192, 192, 12
    $region9: #{tpu_custom_call.1} parent=1 // pred_fallthru
      _
    // Predicated region
    $region10: #{tpu_custom_call.1} parent=1 // pred_check
      _
    $region11: #{tpu_custom_call.1} parent=1 // pred_check_branch
      %38 = sbr.rel (0) target = $region13
    $region12: #{tpu_custom_call.1} parent=1 // pred_region
      %s40 = ssub.s32 2048, 2048
      %41 = vsyncadd [#allocation6], %s40
      %s42 = sshll.u32 [#allocation7], 4
      %s43 = int_to_ptr.vmem [resolvable:$true] %s42
      %48 = dma.hbm_to_vmem [thread:$0]  %s2, 2048, %s43, [#allocation6], 128, 128, 8
    $region13: #{tpu_custom_call.1} parent=1 // pred_fallthru
      _
    // Predicated region
    $region14: #{tpu_custom_call.1} parent=1 // pred_check
      _
    $region15: #{tpu_custom_call.1} parent=1 // pred_check_branch
      %50 = sbr.rel (0) target = $region17
    $region16: #{tpu_custom_call.1} parent=1 // pred_region
      _
    $region17: #{tpu_custom_call.1} parent=1 // pred_fallthru
      _
    // Predicated region
    $region18: #{tpu_custom_call.1} parent=1 // pred_check
      _
    $region19: #{tpu_custom_call.1} parent=1 // pred_check_branch
      %52 = sbr.rel (0) target = $region21
    $region20: #{tpu_custom_call.1} parent=1 // pred_region
      _
    $region21: #{tpu_custom_call.1} parent=1 // pred_fallthru
      _
    // Predicated region
    $region22: #{tpu_custom_call.1} parent=1 // pred_check
      _
    $region23: #{tpu_custom_call.1} parent=1 // pred_check_branch
      %54 = sbr.rel (0) target = $region25
    $region24: #{tpu_custom_call.1} parent=1 // pred_region
      %55 = dma.done [#allocation3], 256
    $region25: #{tpu_custom_call.1} parent=1 // pred_fallthru
      _
    // Predicated region
    $region26: #{tpu_custom_call.1} parent=1 // pred_check
      _
    $region27: #{tpu_custom_call.1} parent=1 // pred_check_branch
      %57 = sbr.rel (0) target = $region29
    $region28: #{tpu_custom_call.1} parent=1 // pred_region
      %58 = dma.done [#allocation6], 3072
    $region29: #{tpu_custom_call.1} parent=1 // pred_fallthru
      _
    // Predicated region
    $region30: #{tpu_custom_call.1} parent=1 // pred_check
      _
    $region31: #{tpu_custom_call.1} parent=1 // pred_check_branch
      %60 = sbr.rel (0) target = $region33
    $region32: #{tpu_custom_call.1} parent=1 // pred_region
      %61 = dma.done [#allocation6], 2048
    $region33: #{tpu_custom_call.1} parent=1 // pred_fallthru
      _
    %v63 = vld [vmem:[#allocation2] sm:$0xff]
    %v64 = vld [vmem:[#allocation2 + $0x8] sm:$0xff]
    %v65 = vmul.f32 %v63, %v63
    %v66 = vmul.f32 %v64, %v64
    %67 = vadd.xlane.f32.xlu0 %v65
    %v68 = vpop.xlane.xlu0 %67
    %69 = vadd.xlane.f32.xlu0 %v66
    %v70 = vpop.xlane.xlu0 %69
    %v71 = vrsqrt.pop %v68
    %v72 = vmul.f32 %v68, %v71
    %vm73 = vcmp.eq.f32.partialorder %v68, inf
    %v74 = vsel %vm73, %v68, %v72
    %vm75 = vcmp.eq.f32.partialorder %v68, 0.0
    %v76 = vand.u32 %v68, 2147483648
    %v77 = vsel %vm75, %v76, %v74
    %v78 = vrsqrt.pop %v70
    %v79 = vmul.f32 %v70, %v78
    %vm80 = vcmp.eq.f32.partialorder %v70, inf
    %v81 = vsel %vm80, %v70, %v79
    %vm82 = vcmp.eq.f32.partialorder %v70, 0.0
    %v83 = vand.u32 %v70, 2147483648
    %v84 = vsel %vm82, %v83, %v81
    %v85 = vmul.f32 %v77, 0.17677669
    %v86 = vmul.f32 %v84, 0.17677669
    %v87 = vmax.f32 %v85, 1e-08
    %v88 = vmax.f32 %v86, 1e-08
    %v89 = vrcp.pop %v87
    %v90 = vrcp.pop %v88
    %v91 = vmul.f32 %v63, %v89
    %v92 = vmul.f32 %v64, %v90
    %v93 = vld [vmem:[%s4] sm:$0x1]
    %v95 = vlaneseq
    %v96 = vshrl.u32 %v95, 7
    %v97 = vsub.s32 0, %v96
    %v98 = vrot.slane %v93, %v97
    %v100 = vmul.f32 %v91, %v98
    %v101 = vmul.f32 %v92, %v98
    %v102 = vpack.c.bf16 %v101, %v100
    %v103 = vpack.c.bf16 %v64, %v63
    %v104 = vld [vmem:[#allocation5] sm:$0xff]
    %v105 = vld [vmem:[#allocation5 + $0x8] sm:$0xf]
    %v106 = vld [vmem:[#allocation5 + $0xc] sm:$0xff]
    %v107 = vld [vmem:[#allocation5 + $0x14] sm:$0xf]
    %v108 = vld [vmem:[#allocation5 + $0x18] sm:$0xff]
    %v109 = vld [vmem:[#allocation5 + $0x20] sm:$0xf]
    %v110 = vld [vmem:[#allocation5 + $0x24] sm:$0xff]
    %v111 = vld [vmem:[#allocation5 + $0x2c] sm:$0xf]
    %v112 = vld [vmem:[#allocation5 + $0x30] sm:$0xff]
    %v113 = vld [vmem:[#allocation5 + $0x38] sm:$0xf]
    %v114 = vld [vmem:[#allocation5 + $0x3c] sm:$0xff]
    %v115 = vld [vmem:[#allocation5 + $0x44] sm:$0xf]
    %v116 = vld [vmem:[#allocation5 + $0x48] sm:$0xff]
    %v117 = vld [vmem:[#allocation5 + $0x50] sm:$0xf]
    %v118 = vld [vmem:[#allocation5 + $0x54] sm:$0xff]
    %v119 = vld [vmem:[#allocation5 + $0x5c] sm:$0xf]
    %v120 = vld [vmem:[#allocation5 + $0x60] sm:$0xff]
    %v121 = vld [vmem:[#allocation5 + $0x68] sm:$0xf]
    %v122 = vld [vmem:[#allocation5 + $0x6c] sm:$0xff]
    %v123 = vld [vmem:[#allocation5 + $0x74] sm:$0xf]
    %v124 = vld [vmem:[#allocation5 + $0x78] sm:$0xff]
    %v125 = vld [vmem:[#allocation5 + $0x80] sm:$0xf]
    %v126 = vld [vmem:[#allocation5 + $0x84] sm:$0xff]
    %v127 = vld [vmem:[#allocation5 + $0x8c] sm:$0xf]
    %v128 = vld [vmem:[#allocation5 + $0x90] sm:$0xff]
    %v129 = vld [vmem:[#allocation5 + $0x98] sm:$0xf]
    %v130 = vld [vmem:[#allocation5 + $0x9c] sm:$0xff]
    %v131 = vld [vmem:[#allocation5 + $0xa4] sm:$0xf]
    %v132 = vld [vmem:[#allocation5 + $0xa8] sm:$0xff]
    %v133 = vld [vmem:[#allocation5 + $0xb0] sm:$0xf]
    %v134 = vld [vmem:[#allocation5 + $0xb4] sm:$0xff]
    %v135 = vld [vmem:[#allocation5 + $0xbc] sm:$0xf]
    %v136 = vld [vmem:[%s3] sm:$0x7]
    %v138 = vlaneseq
    %v139 = vshrl.u32 %v138, 7
    %v140 = vsub.s32 0, %v139
    %v141 = vrot.slane %v136, %v140
    %v142 = vlaneseq
    %v143 = vshrl.u32 %v142, 7
    %v144 = vsub.s32 1, %v143
    %v145 = vrot.slane %v136, %v144
    %v146 = vlaneseq
    %v147 = vshrl.u32 %v146, 7
    %v148 = vsub.s32 2, %v147
    %v149 = vrot.slane %v136, %v148
    %v185 = vunpack.c.l.b16 %v104
    %v186 = vunpack.c.h.b16 %v104
    %v187 = vunpack.c.l.b16 %v105
    %v188 = vunpack.c.l.b16 %v106
    %v189 = vunpack.c.h.b16 %v106
    %v190 = vunpack.c.l.b16 %v107
    %v191 = vunpack.c.l.b16 %v108
    %v192 = vunpack.c.h.b16 %v108
    %v193 = vunpack.c.l.b16 %v109
    %v194 = vunpack.c.l.b16 %v110
    %v195 = vunpack.c.h.b16 %v110
    %v196 = vunpack.c.l.b16 %v111
    %v197 = vunpack.c.l.b16 %v112
    %v198 = vunpack.c.h.b16 %v112
    %v199 = vunpack.c.l.b16 %v113
    %v200 = vunpack.c.l.b16 %v114
    %v201 = vunpack.c.h.b16 %v114
    %v202 = vunpack.c.l.b16 %v115
    %v203 = vunpack.c.l.b16 %v116
    %v204 = vunpack.c.h.b16 %v116
    %v205 = vunpack.c.l.b16 %v117
    %v206 = vunpack.c.l.b16 %v118
    %v207 = vunpack.c.h.b16 %v118
    %v208 = vunpack.c.l.b16 %v119
    %v209 = vunpack.c.l.b16 %v120
    %v210 = vunpack.c.h.b16 %v120
    %v211 = vunpack.c.l.b16 %v121
    %v212 = vunpack.c.l.b16 %v122
    %v213 = vunpack.c.h.b16 %v122
    %v214 = vunpack.c.l.b16 %v123
    %v215 = vunpack.c.l.b16 %v124
    %v216 = vunpack.c.h.b16 %v124
    %v217 = vunpack.c.l.b16 %v125
    %v218 = vunpack.c.l.b16 %v126
    %v219 = vunpack.c.h.b16 %v126
    %v220 = vunpack.c.l.b16 %v127
    %v221 = vunpack.c.l.b16 %v128
    %v222 = vunpack.c.h.b16 %v128
    %v223 = vunpack.c.l.b16 %v129
    %v224 = vunpack.c.l.b16 %v130
    %v225 = vunpack.c.h.b16 %v130
    %v226 = vunpack.c.l.b16 %v131
    %v227 = vunpack.c.l.b16 %v132
    %v228 = vunpack.c.h.b16 %v132
    %v229 = vunpack.c.l.b16 %v133
    %v230 = vunpack.c.l.b16 %v134
    %v231 = vunpack.c.h.b16 %v134
    %v232 = vunpack.c.l.b16 %v135
    %v233 = vpack.c.b16 %v188, %v185
    %v234 = vpack.c.b16 %v189, %v186
    %v235 = vpack.c.b16 %v190, %v187
    %v236 = vpack.c.b16 %v194, %v191
    %v237 = vpack.c.b16 %v195, %v192
    %v238 = vpack.c.b16 %v196, %v193
    %v239 = vpack.c.b16 %v200, %v197
    %v240 = vpack.c.b16 %v201, %v198
    %v241 = vpack.c.b16 %v202, %v199
    %v242 = vpack.c.b16 %v206, %v203
    %v243 = vpack.c.b16 %v207, %v204
    %v244 = vpack.c.b16 %v208, %v205
    %v245 = vpack.c.b16 %v212, %v209
    %v246 = vpack.c.b16 %v213, %v210
    %v247 = vpack.c.b16 %v214, %v211
    %v248 = vpack.c.b16 %v218, %v215
    %v249 = vpack.c.b16 %v219, %v216
    %v250 = vpack.c.b16 %v220, %v217
    %v251 = vpack.c.b16 %v224, %v221
    %v252 = vpack.c.b16 %v225, %v222
    %v253 = vpack.c.b16 %v226, %v223
    %v254 = vpack.c.b16 %v230, %v227
    %v255 = vpack.c.b16 %v231, %v228
    %v256 = vpack.c.b16 %v232, %v229
    %281 = vmatprep.subr.bf16.mxu0 %v255
    %282 = vmatpush1.bf16.msra.mxu0 %v254
    %283 = vmatprep.subr.bf16.mxu0 %v252
    %284 = vmatpush1.bf16.msra.mxu0 %v251
    %285 = vmatprep.subr.bf16.mxu0 %v249
    %286 = vmatpush1.bf16.msra.mxu0 %v248
    %287 = vmatprep.subr.bf16.mxu0 %v246
    %288 = vmatpush1.bf16.msra.mxu0 %v245
    %289 = vmatprep.subr.bf16.mxu0 %v243
    %290 = vmatpush1.bf16.msra.mxu0 %v242
    %291 = vmatprep.subr.bf16.mxu0 %v240
    %292 = vmatpush1.bf16.msra.mxu0 %v239
    %293 = vmatprep.subr.bf16.mxu0 %v237
    %294 = vmatpush1.bf16.msra.mxu0 %v236
    %295 = vmatprep.subr.bf16.mxu0 %v234
    %296 = vmatpush1.bf16.msra.mxu0 %v233
    %297 = vmatprep.subr.bf16.mxu0 0
    %298 = vmatpush2.bf16.msra.mxu0 0
    %299 = vmatprep.subr.bf16.mxu0 0
    %300 = vmatpush2.bf16.msra.mxu0 0
    %301 = vmatprep.subr.bf16.mxu0 0
    %302 = vmatpush2.bf16.msra.mxu0 0
    %303 = vmatprep.subr.bf16.mxu0 0
    %304 = vmatpush2.bf16.msra.mxu0 0
    %305 = vmatprep.subr.bf16.mxu0 0
    %306 = vmatpush2.bf16.msra.mxu0 0
    %307 = vmatprep.subr.bf16.mxu0 0
    %308 = vmatpush2.bf16.msra.mxu0 0
    %309 = vmatprep.subr.bf16.mxu0 0
    %310 = vmatpush2.bf16.msra.mxu0 0
    %311 = vmatprep.subr.bf16.mxu0 0
    %312 = vmatpush2.bf16.msra.mxu0 0
    %313 = vmatprep.mubr.bf16.mxu0 0
    %314 = vmatmul.mubr.bf16.gmra.mxu0 %v102
    %v315 = vpop.f32.mrf.mxu0
    %v316 = vadd.f32 %v141, %v315
    %v317 = vpop.f32.mrf.mxu0
    %v318 = vadd.f32 %v145, %v317
    %v319 = vpop.f32.mrf.mxu0
    %v320 = vadd.f32 %v141, %v319
    %v321 = vpop.f32.mrf.mxu0
    %v322 = vadd.f32 %v145, %v321
    %323 = vdwg.mxu0
    %324 = vmatprep.subr.bf16.mxu0 0
    %325 = vmatpush1.bf16.msra.mxu0 %v256
    %326 = vmatprep.subr.bf16.mxu0 0
    %327 = vmatpush1.bf16.msra.mxu0 %v253
    %328 = vmatprep.subr.bf16.mxu0 0
    %329 = vmatpush1.bf16.msra.mxu0 %v250
    %330 = vmatprep.subr.bf16.mxu0 0
    %331 = vmatpush1.bf16.msra.mxu0 %v247
    %332 = vmatprep.subr.bf16.mxu0 0
    %333 = vmatpush1.bf16.msra.mxu0 %v244
    %334 = vmatprep.subr.bf16.mxu0 0
    %335 = vmatpush1.bf16.msra.mxu0 %v241
    %336 = vmatprep.subr.bf16.mxu0 0
    %337 = vmatpush1.bf16.msra.mxu0 %v238
    %338 = vmatprep.subr.bf16.mxu0 0
    %339 = vmatpush1.bf16.msra.mxu0 %v235
    %340 = vmatprep.subr.bf16.mxu0 0
    %341 = vmatpush2.bf16.msra.mxu0 0
    %342 = vmatprep.subr.bf16.mxu0 0
    %343 = vmatpush2.bf16.msra.mxu0 0
    %344 = vmatprep.subr.bf16.mxu0 0
    %345 = vmatpush2.bf16.msra.mxu0 0
    %346 = vmatprep.subr.bf16.mxu0 0
    %347 = vmatpush2.bf16.msra.mxu0 0
    %348 = vmatprep.subr.bf16.mxu0 0
    %349 = vmatpush2.bf16.msra.mxu0 0
    %350 = vmatprep.subr.bf16.mxu0 0
    %351 = vmatpush2.bf16.msra.mxu0 0
    %352 = vmatprep.subr.bf16.mxu0 0
    %353 = vmatpush2.bf16.msra.mxu0 0
    %354 = vmatprep.subr.bf16.mxu0 0
    %355 = vmatpush2.bf16.msra.mxu0 0
    %356 = vmatprep.mubr.bf16.mxu0 0
    %357 = vmatmul.mubr.bf16.gmra.mxu0 %v102
    %v358 = vpop.f32.mrf.mxu0
    %v359 = vadd.f32 %v149, %v358
    %v360 = vpop.f32.mrf.mxu0
    %v361 = vpop.f32.mrf.mxu0
    %v362 = vadd.f32 %v149, %v361
    %v363 = vpop.f32.mrf.mxu0
    %364 = vdwg.mxu0
    %v365 = vld [vmem:[#allocation7] sm:$0xff]
    %v366 = vld [vmem:[#allocation7 + $0x8] sm:$0xff]
    %v367 = vld [vmem:[#allocation7 + $0x10] sm:$0xff]
    %v368 = vld [vmem:[#allocation7 + $0x18] sm:$0xff]
    %v369 = vld [vmem:[#allocation7 + $0x20] sm:$0xff]
    %v370 = vld [vmem:[#allocation7 + $0x28] sm:$0xff]
    %v371 = vld [vmem:[#allocation7 + $0x30] sm:$0xff]
    %v372 = vld [vmem:[#allocation7 + $0x38] sm:$0xff]
    %v373 = vld [vmem:[#allocation7 + $0x40] sm:$0xff]
    %v374 = vld [vmem:[#allocation7 + $0x48] sm:$0xff]
    %v375 = vld [vmem:[#allocation7 + $0x50] sm:$0xff]
    %v376 = vld [vmem:[#allocation7 + $0x58] sm:$0xff]
    %v377 = vld [vmem:[#allocation7 + $0x60] sm:$0xff]
    %v378 = vld [vmem:[#allocation7 + $0x68] sm:$0xff]
    %v379 = vld [vmem:[#allocation7 + $0x70] sm:$0xff]
    %v380 = vld [vmem:[#allocation7 + $0x78] sm:$0xff]
    %v397 = vunpack.c.l.b16 %v365
    %v398 = vunpack.c.h.b16 %v365
    %v399 = vunpack.c.l.b16 %v366
    %v400 = vunpack.c.h.b16 %v366
    %v401 = vunpack.c.l.b16 %v367
    %v402 = vunpack.c.h.b16 %v367
    %v403 = vunpack.c.l.b16 %v368
    %v404 = vunpack.c.h.b16 %v368
    %v405 = vunpack.c.l.b16 %v369
    %v406 = vunpack.c.h.b16 %v369
    %v407 = vunpack.c.l.b16 %v370
    %v408 = vunpack.c.h.b16 %v370
    %v409 = vunpack.c.l.b16 %v371
    %v410 = vunpack.c.h.b16 %v371
    %v411 = vunpack.c.l.b16 %v372
    %v412 = vunpack.c.h.b16 %v372
    %v413 = vunpack.c.l.b16 %v373
    %v414 = vunpack.c.h.b16 %v373
    %v415 = vunpack.c.l.b16 %v374
    %v416 = vunpack.c.h.b16 %v374
    %v417 = vunpack.c.l.b16 %v375
    %v418 = vunpack.c.h.b16 %v375
    %v419 = vunpack.c.l.b16 %v376
    %v420 = vunpack.c.h.b16 %v376
    %v421 = vunpack.c.l.b16 %v377
    %v422 = vunpack.c.h.b16 %v377
    %v423 = vunpack.c.l.b16 %v378
    %v424 = vunpack.c.h.b16 %v378
    %v425 = vunpack.c.l.b16 %v379
    %v426 = vunpack.c.h.b16 %v379
    %v427 = vunpack.c.l.b16 %v380
    %v428 = vunpack.c.h.b16 %v380
    %v429 = vpack.c.b16 %v399, %v397
    %v430 = vpack.c.b16 %v400, %v398
    %v431 = vpack.c.b16 %v403, %v401
    %v432 = vpack.c.b16 %v404, %v402
    %v433 = vpack.c.b16 %v407, %v405
    %v434 = vpack.c.b16 %v408, %v406
    %v435 = vpack.c.b16 %v411, %v409
    %v436 = vpack.c.b16 %v412, %v410
    %v437 = vpack.c.b16 %v415, %v413
    %v438 = vpack.c.b16 %v416, %v414
    %v439 = vpack.c.b16 %v419, %v417
    %v440 = vpack.c.b16 %v420, %v418
    %v441 = vpack.c.b16 %v423, %v421
    %v442 = vpack.c.b16 %v424, %v422
    %v443 = vpack.c.b16 %v427, %v425
    %v444 = vpack.c.b16 %v428, %v426
    %461 = vmatprep.subr.bf16.mxu0 %v444
    %462 = vmatpush1.bf16.msra.mxu0 %v443
    %463 = vmatprep.subr.bf16.mxu0 %v442
    %464 = vmatpush1.bf16.msra.mxu0 %v441
    %465 = vmatprep.subr.bf16.mxu0 %v440
    %466 = vmatpush1.bf16.msra.mxu0 %v439
    %467 = vmatprep.subr.bf16.mxu0 %v438
    %468 = vmatpush1.bf16.msra.mxu0 %v437
    %469 = vmatprep.subr.bf16.mxu0 %v436
    %470 = vmatpush1.bf16.msra.mxu0 %v435
    %471 = vmatprep.subr.bf16.mxu0 %v434
    %472 = vmatpush1.bf16.msra.mxu0 %v433
    %473 = vmatprep.subr.bf16.mxu0 %v432
    %474 = vmatpush1.bf16.msra.mxu0 %v431
    %475 = vmatprep.subr.bf16.mxu0 %v430
    %476 = vmatpush1.bf16.msra.mxu0 %v429
    %477 = vmatprep.subr.bf16.mxu0 0
    %478 = vmatpush2.bf16.msra.mxu0 0
    %479 = vmatprep.subr.bf16.mxu0 0
    %480 = vmatpush2.bf16.msra.mxu0 0
    %481 = vmatprep.subr.bf16.mxu0 0
    %482 = vmatpush2.bf16.msra.mxu0 0
    %483 = vmatprep.subr.bf16.mxu0 0
    %484 = vmatpush2.bf16.msra.mxu0 0
    %485 = vmatprep.subr.bf16.mxu0 0
    %486 = vmatpush2.bf16.msra.mxu0 0
    %487 = vmatprep.subr.bf16.mxu0 0
    %488 = vmatpush2.bf16.msra.mxu0 0
    %489 = vmatprep.subr.bf16.mxu0 0
    %490 = vmatpush2.bf16.msra.mxu0 0
    %491 = vmatprep.subr.bf16.mxu0 0
    %492 = vmatpush2.bf16.msra.mxu0 0
    %493 = vmatprep.mubr.bf16.mxu0 0
    %494 = vmatmul.mubr.bf16.gmra.mxu0 %v103
    %v495 = vpop.f32.mrf.mxu0
    %v496 = vadd.f32 0.0, %v495
    %v497 = vpop.f32.mrf.mxu0
    %v498 = vadd.f32 0.0, %v497
    %v499 = vpop.f32.mrf.mxu0
    %v500 = vadd.f32 0.0, %v499
    %v501 = vpop.f32.mrf.mxu0
    %v502 = vadd.f32 0.0, %v501
    %503 = vdwg.mxu0
    %v504 = vadd.f32 %v316, %v496
    %v505 = vadd.f32 %v320, %v500
    %v506 = vadd.f32 %v318, %v498
    %v507 = vadd.f32 %v322, %v502
    %v508 = vtanh.pop %v504
    %v509 = vtanh.pop %v505
    %v510 = vadd.f32 %v508, 1.0
    %v511 = vadd.f32 %v509, 1.0
    %v512 = vxor.u32 %v506, 2147483648
    %v513 = vxor.u32 %v507, 2147483648
    %v514 = vmul.f32 %v512, 1.442695
    %v515 = vpow.pop %v514
    %v516 = vmul.f32 %v513, 1.442695
    %v517 = vpow.pop %v516
    %v518 = vadd.f32 %v515, 1.0
    %v519 = vadd.f32 %v517, 1.0
    %v520 = vrcp.pop %v518
    %v521 = vmul.f32 1.0, %v520
    %v522 = vrcp.pop %v519
    %v523 = vmul.f32 1.0, %v522
    %v524 = vmul.f32 %v521, %v63
    %v525 = vmul.f32 %v523, %v64
    %v526 = vsub.f32 1.0, %v521
    %v527 = vsub.f32 1.0, %v523
    %v528 = vmul.f32 %v510, %v63
    %v529 = vmul.f32 %v511, %v64
    %v530 = vadd.f32 %v359, %v528
    %v531 = vadd.f32 %v362, %v529
    %v532 = vtanh.pop %v530
    %v533 = vtanh.pop %v531
    %v534 = vmul.f32 %v526, %v532
    %v535 = vmul.f32 %v527, %v533
    %v536 = vadd.f32 %v524, %v534
    %v537 = vadd.f32 %v525, %v535
    %538 = vst [vmem:[#allocation8] sm:$0xff] %v536
    %539 = vst [vmem:[#allocation8 + $0x8] sm:$0xff] %v537
    // Predicated region
    $region34: #{tpu_custom_call.1} parent=1 // pred_check
      _
    $region35: #{tpu_custom_call.1} parent=1 // pred_check_branch
      %541 = sbr.rel (0) target = $region37
    $region36: #{tpu_custom_call.1} parent=1 // pred_region
      %s543 = ssub.s32 256, 256
      %544 = vsyncadd [#allocation4], %s543
      %s545 = sshll.u32 [#allocation8], 4
      %s546 = int_to_ptr.vmem [resolvable:$true] %s545
      %551 = dma.vmem_to_hbm [thread:$0]  %s546, 256, %s5, [#allocation4], 128, 128, 8
    $region37: #{tpu_custom_call.1} parent=1 // pred_fallthru
      _
    // Predicated region
    $region38: #{tpu_custom_call.1} parent=1 // pred_check
      _
    $region39: #{tpu_custom_call.1} parent=1 // pred_check_branch
      %553 = sbr.rel (0) target = $region41
    $region40: #{tpu_custom_call.1} parent=1 // pred_region
      %554 = dma.done [#allocation4], 256
    $region41: #{tpu_custom_call.1} parent=1 // pred_fallthru
      _
    %555 = vsyncpa [#allocation3], 1
    %556 = vsyncpa [#allocation6], 1
    %557 = vsyncpa [#allocation4], 1

</llo_original>
